<compile_context>
chip_gen: v6e
topology: v6e:2x2x1
jax: 0.10.0
libtpu: 0.0.40
codegen_flags: <defaults>
</compile_context>

<pallas_src>
import functools

import jax
import jax.numpy as jnp
from jax import lax
from jax.experimental import pallas as pl
from jax.experimental.pallas import tpu as pltpu


def _sanet_kernel_single(content_ref, kt_ref, v_ref, out_ref):
    """Single kv-block path (HW fits in one score tile): plain softmax.

    content_ref : (C, TQ)  f32   content tile (queries on lanes)
    kt_ref      : (HW, C)  bf16  content_s^T, full, VMEM-resident per batch
    v_ref       : (C, HW)  bf16  style, full, VMEM-resident per batch
    out_ref     : (2C, TQ) f32   [content tile ; O tile]
    """
    c, _ = content_ref.shape

    content_tile = content_ref[...]                       # (C, TQ) f32
    q_bf = content_tile.astype(jnp.bfloat16)

    # S^T: kv on sublanes, queries on lanes.  Natural (M,K)x(K,N) on the MXU.
    s_t = jnp.dot(kt_ref[...], q_bf,
                  preferred_element_type=jnp.float32)     # (HW, TQ)
    m = jnp.max(s_t, axis=0, keepdims=True)               # (1, TQ)
    p_t = jnp.exp(s_t - m)                                 # (HW, TQ)
    l = jnp.sum(p_t, axis=0, keepdims=True)                # (1, TQ)
    o = jnp.dot(v_ref[...], p_t.astype(jnp.bfloat16),
                preferred_element_type=jnp.float32)        # (C, TQ)

    out_ref[0:c, :] = content_tile.astype(out_ref.dtype)
    out_ref[c:2 * c, :] = (o * pl.reciprocal(l, approx=True)).astype(out_ref.dtype)


def _sanet_kernel(content_ref, kt_ref, v_ref, out_ref,
                  acc_ref, m_ref, l_ref, *, tk):
    """Multi kv-block path: online softmax over the kv loop.

    content_ref : (C, TQ)  f32   content tile (queries on lanes)
    kt_ref      : (HW, C)  bf16  content_s^T, full, VMEM-resident per batch
    v_ref       : (C, HW)  bf16  style, full, VMEM-resident per batch
    out_ref     : (2C, TQ) f32   [content tile ; O tile]
    acc_ref     : (C, TQ)  f32   online-softmax weighted sum of V
    m_ref,l_ref : (1, TQ)  f32   running max / running normalizer
    """
    c, tq = content_ref.shape
    hw = kt_ref.shape[0]
    n_kv = hw // tk

    content_tile = content_ref[...]                    # (C, TQ) f32
    q_bf = content_tile.astype(jnp.bfloat16)           # RHS of the S^T matmul

    acc_ref[...] = jnp.zeros(acc_ref.shape, acc_ref.dtype)
    m_ref[...] = jnp.full(m_ref.shape, -jnp.inf, m_ref.dtype)
    l_ref[...] = jnp.zeros(l_ref.shape, l_ref.dtype)

    def body(step, carry):
        start = pl.multiple_of(step * tk, tk)
        k_blk = kt_ref[pl.ds(start, tk), :]            # (TK, C)  bf16
        v_blk = v_ref[:, pl.ds(start, tk)]             # (C, TK)  bf16

        # S^T tile: kv on sublanes, queries on lanes.  Natural (M,K)x(K,N).
        s_t = jnp.dot(k_blk, q_bf, preferred_element_type=jnp.float32)  # (TK, TQ)

        m_prev = m_ref[...]
        m_new = jnp.maximum(m_prev, jnp.max(s_t, axis=0, keepdims=True))  # (1, TQ)
        alpha = jnp.exp(m_prev - m_new)
        p_t = jnp.exp(s_t - m_new)                                        # (TK, TQ)

        l_ref[...] = alpha * l_ref[...] + jnp.sum(p_t, axis=0, keepdims=True)
        acc_ref[...] = alpha * acc_ref[...] + jnp.dot(
            v_blk, p_t.astype(jnp.bfloat16), preferred_element_type=jnp.float32)
        m_ref[...] = m_new
        return carry

    lax.fori_loop(0, n_kv, body, 0, unroll=n_kv <= 8)

    # Finalize: content passthrough into the first C channels, normalized
    # attention output into the second C channels.  Both lane-dense (TQ lanes).
    out_ref[0:c, :] = content_tile.astype(out_ref.dtype)
    o_tile = acc_ref[...] * pl.reciprocal(l_ref[...], approx=True)
    out_ref[c:2 * c, :] = o_tile.astype(out_ref.dtype)


def _vmem_limit_bytes(c, hw, tq):
    """Rough VMEM budget: resident K/V (double-buffered) + tiles + scratch."""
    bf16, f32 = 2, 4
    kv_resident = 2 * (hw * c * bf16) * 2            # K^T and V, x2 buffers
    q_in = c * tq * f32 * 2
    out = 2 * c * tq * f32 * 2
    scratch = c * tq * f32 + 2 * tq * f32 * 8
    total = kv_resident + q_in + out + scratch + (4 << 20)
    # Never below the default scoped limit; stay under v5e/v6e physical VMEM.
    return int(min(max(total, 32 << 20), 112 << 20))


def sanet_forward(content, content_s, style, *, tq=None, tk=None):
    """content, content_s, style: (B, C, H, W) float32 -> (B, 2C, H, W)."""
    b, c, h, w = content.shape
    hw = h * w
    out_dtype = content.dtype

    # q tile (lane axis of every block): multiple of 128 with >=2 grid steps
    # along the q axis when possible (pipeline depth + lane-dense output).
    if tq is None:
        for cand in (512, 256, 128):
            if hw % cand == 0 and hw // cand >= 2:
                tq = cand
                break
        else:
            tq = hw
    # kv tile: sliced in-kernel from the VMEM-resident K/V copies.
    if tk is None:
        tk = next((t for t in (512, 256, 128) if hw % t == 0), hw)
    assert hw % tq == 0 and hw % tk == 0, (hw, tq, tk)
    n_kv = hw // tk

    content_f = content.reshape(b, c, hw)                         # f32 (exact passthrough)
    kt = content_s.reshape(b, c, hw).transpose(0, 2, 1)           # (B, HW, C)
    kt = kt.astype(jnp.bfloat16)
    v = style.reshape(b, c, hw).astype(jnp.bfloat16)              # (B, C, HW)

    if n_kv == 1:
        kernel = _sanet_kernel_single
        scratch_shapes = []
    else:
        kernel = functools.partial(_sanet_kernel, tk=tk)
        scratch_shapes = [
            pltpu.VMEM((c, tq), jnp.float32),   # acc
            pltpu.VMEM((1, tq), jnp.float32),   # m (running max)
            pltpu.VMEM((1, tq), jnp.float32),   # l (running sum)
        ]

    out_flat = pl.pallas_call(
        kernel,
        out_shape=jax.ShapeDtypeStruct((b, 2 * c, hw), out_dtype),
        grid_spec=pltpu.PrefetchScalarGridSpec(
            num_scalar_prefetch=0,
            grid=(b, hw // tq),
            in_specs=[
                # content: per-(batch, q-tile) block.
                pl.BlockSpec((None, c, tq), lambda bi, qi: (bi, 0, qi)),
                # content_s^T: full per-batch block, constant along q -> DMA'd
                # once per batch element and kept VMEM-resident.
                pl.BlockSpec((None, hw, c), lambda bi, qi: (bi, 0, 0)),
                # style: full per-batch block, constant along q.
                pl.BlockSpec((None, c, hw), lambda bi, qi: (bi, 0, 0)),
            ],
            out_specs=pl.BlockSpec((None, 2 * c, tq), lambda bi, qi: (bi, 0, qi)),
            scratch_shapes=scratch_shapes,
        ),
        compiler_params=pltpu.CompilerParams(
            dimension_semantics=("parallel", "parallel"),
            vmem_limit_bytes=_vmem_limit_bytes(c, hw, tq),
        ),
    )(content_f, kt, v)

    return out_flat.reshape(b, 2 * c, h, w)


def _reference(content, content_s, style):
    """Pure-JAX f32 reference of the PyTorch SANet forward."""
    b, c, h, w = content.shape
    hw = h * w
    fc = content.reshape(b, c, hw)
    fs = content_s.reshape(b, c, hw)
    s = jnp.einsum("bci,bcj->bij", fc, fs)           # S[i, j]
    p = jax.nn.softmax(s, axis=-1)
    st = style.reshape(b, c, hw)
    o = jnp.einsum("bcj,bij->bci", st, p).reshape(b, c, h, w)
    return jnp.concatenate([content, o], axis=1)


if __name__ == "__main__":
    key = jax.random.PRNGKey(0)
    k1, k2, k3 = jax.random.split(key, 3)

    b, c, h, w = 2, 8, 16, 16   # HW = 256 -> grid = (2 batches, 2 q-tiles)
    content = jax.random.normal(k1, (b, c, h, w), dtype=jnp.float32)
    content_s = jax.random.normal(k2, (b, c, h, w), dtype=jnp.float32)
    style = jax.random.normal(k3, (b, c, h, w), dtype=jnp.float32)

    out = jax.block_until_ready(sanet_forward(content, content_s, style))
    ref = _reference(content, content_s, style)

    assert out.shape == (b, 2 * c, h, w), out.shape
    # The content passthrough is untouched f32 -> exact.
    assert jnp.array_equal(out[:, :c], content), "content passthrough mismatch"
    # Attention half uses bf16 MXU operands + approx reciprocal -> loose tol.
    diff = jnp.abs(out[:, c:] - ref[:, c:])
    err_max = float(jnp.max(diff))
    err_mean = float(jnp.mean(diff))
    assert err_max < 2.5e-1 and err_mean < 2.5e-2, (err_max, err_mean)

    # Exercise the multi-kv-block (online softmax) path too.
    out2 = jax.block_until_ready(sanet_forward(content, content_s, style, tk=128))
    diff2 = jnp.abs(out2[:, c:] - ref[:, c:])
    assert float(jnp.max(diff2)) < 2.5e-1 and float(jnp.mean(diff2)) < 2.5e-2

    print("KERNEL_OK")
</pallas_src>

<mosaic_0001>
module attributes {stable_mosaic.version = 11 : i64} {
  func.func @_sanet_kernel_single(%arg0: i32, %arg1: i32, %arg2: memref<1x8x128xf32, #tpu.memory_space<vmem>>, %arg3: memref<1x256x8xbf16, #tpu.memory_space<vmem>>, %arg4: memref<1x8x256xbf16, #tpu.memory_space<vmem>>, %arg5: memref<1x16x128xf32, #tpu.memory_space<vmem>>) attributes {dimension_semantics = [#tpu.dimension_semantics<parallel>, #tpu.dimension_semantics<parallel>], iteration_bounds = array<i64: 2, 2>, scalar_prefetch = 0 : i64, scratch_operands = 0 : i64, tpu.core_type = #tpu.core_type<tc>, window_params = [{transform_indices = @transform_0, window_bounds = array<i64: 1, 8, 128>}, {transform_indices = @transform_1, window_bounds = array<i64: 1, 256, 8>}, {transform_indices = @transform_2, window_bounds = array<i64: 1, 8, 256>}, {transform_indices = @transform_3, window_bounds = array<i64: 1, 16, 128>}]} {
    %c0 = arith.constant 0 : index
    %c0_0 = arith.constant 0 : index
    %c0_1 = arith.constant 0 : index
    %0 = vector.load %arg2[%c0, %c0_0, %c0_1] : memref<1x8x128xf32, #tpu.memory_space<vmem>>, vector<1x8x128xf32>
    %1 = vector.shape_cast %0 : vector<1x8x128xf32> to vector<8x128xf32>
    %2 = arith.truncf %1 : vector<8x128xf32> to vector<8x128xbf16>
    %c0_2 = arith.constant 0 : index
    %c0_3 = arith.constant 0 : index
    %c0_4 = arith.constant 0 : index
    %3 = vector.load %arg3[%c0_2, %c0_3, %c0_4] : memref<1x256x8xbf16, #tpu.memory_space<vmem>>, vector<1x256x8xbf16>
    %4 = vector.shape_cast %3 : vector<1x256x8xbf16> to vector<256x8xbf16>
    %cst = arith.constant dense<0.000000e+00> : vector<256x128xf32>
    %5 = tpu.matmul %4, %2, %cst {dimension_numbers = #tpu.dot_dimension_numbers<[1], [0], [0], [1], [0, 0, 1, 1], [], []>} : vector<256x8xbf16>, vector<8x128xbf16>, vector<256x128xf32> -> vector<256x128xf32>
    %cst_5 = arith.constant dense<0xFF800000> : vector<128xf32>
    %6 = vector.multi_reduction <maximumf>, %5, %cst_5 [0] : vector<256x128xf32> to vector<128xf32>
    %7 = vector.shape_cast %6 : vector<128xf32> to vector<1x128xf32>
    %8 = vector.broadcast %7 : vector<1x128xf32> to vector<256x128xf32>
    %9 = arith.subf %5, %8 : vector<256x128xf32>
    %10 = math.exp %9 : vector<256x128xf32>
    %cst_6 = arith.constant dense<0.000000e+00> : vector<128xf32>
    %11 = vector.multi_reduction <add>, %10, %cst_6 [0] : vector<256x128xf32> to vector<128xf32>
    %12 = vector.shape_cast %11 : vector<128xf32> to vector<1x128xf32>
    %c0_7 = arith.constant 0 : index
    %c0_8 = arith.constant 0 : index
    %c0_9 = arith.constant 0 : index
    %13 = vector.load %arg4[%c0_7, %c0_8, %c0_9] : memref<1x8x256xbf16, #tpu.memory_space<vmem>>, vector<1x8x256xbf16>
    %14 = vector.shape_cast %13 : vector<1x8x256xbf16> to vector<8x256xbf16>
    %15 = arith.truncf %10 : vector<256x128xf32> to vector<256x128xbf16>
    %cst_10 = arith.constant dense<0.000000e+00> : vector<8x128xf32>
    %16 = tpu.matmul %14, %15, %cst_10 {dimension_numbers = #tpu.dot_dimension_numbers<[1], [0], [0], [1], [0, 0, 1, 1], [], []>} : vector<8x256xbf16>, vector<256x128xbf16>, vector<8x128xf32> -> vector<8x128xf32>
    %c0_11 = arith.constant 0 : index
    %c0_12 = arith.constant 0 : index
    %c0_13 = arith.constant 0 : index
    %17 = vector.load %arg5[%c0_11, %c0_12, %c0_13] : memref<1x16x128xf32, #tpu.memory_space<vmem>>, vector<1x8x128xf32>
    %18 = vector.shape_cast %17 : vector<1x8x128xf32> to vector<8x128xf32>
    %19 = vector.shape_cast %1 : vector<8x128xf32> to vector<1x8x128xf32>
    tpu.vector_store %arg5[%c0_11, %c0_12, %c0_13], %19 {strides = array<i32>} : memref<1x16x128xf32, #tpu.memory_space<vmem>>, vector<1x8x128xf32>,
    %20 = tpu.reciprocal %12 {approx = true} : vector<1x128xf32> -> vector<1x128xf32>
    %21 = vector.broadcast %20 : vector<1x128xf32> to vector<8x128xf32>
    %22 = arith.mulf %16, %21 : vector<8x128xf32>
    %c0_14 = arith.constant 0 : index
    %c8 = arith.constant 8 : index
    %c0_15 = arith.constant 0 : index
    %23 = vector.load %arg5[%c0_14, %c8, %c0_15] : memref<1x16x128xf32, #tpu.memory_space<vmem>>, vector<1x8x128xf32>
    %24 = vector.shape_cast %23 : vector<1x8x128xf32> to vector<8x128xf32>
    %25 = vector.shape_cast %22 : vector<8x128xf32> to vector<1x8x128xf32>
    tpu.vector_store %arg5[%c0_14, %c8, %c0_15], %25 {strides = array<i32>} : memref<1x16x128xf32, #tpu.memory_space<vmem>>, vector<1x8x128xf32>,
    return
  }
  func.func @transform_0(%arg0: i32, %arg1: i32) -> (i32, i32, i32) {
    %c0_i32 = arith.constant 0 : i32
    %c0_i32_0 = arith.constant 0 : i32
    return %arg0, %c0_i32, %arg1 : i32, i32, i32
  }
  func.func @transform_1(%arg0: i32, %arg1: i32) -> (i32, i32, i32) {
    %c0_i32 = arith.constant 0 : i32
    %c0_i32_0 = arith.constant 0 : i32
    %c0_i32_1 = arith.constant 0 : i32
    return %arg0, %c0_i32, %c0_i32_0 : i32, i32, i32
  }
  func.func @transform_2(%arg0: i32, %arg1: i32) -> (i32, i32, i32) {
    %c0_i32 = arith.constant 0 : i32
    %c0_i32_0 = arith.constant 0 : i32
    %c0_i32_1 = arith.constant 0 : i32
    return %arg0, %c0_i32, %c0_i32_0 : i32, i32, i32
  }
  func.func @transform_3(%arg0: i32, %arg1: i32) -> (i32, i32, i32) {
    %c0_i32 = arith.constant 0 : i32
    %c0_i32_0 = arith.constant 0 : i32
    return %arg0, %c0_i32, %arg1 : i32, i32, i32
  }
}

</mosaic_0001>

<llo_original>
// kernel: tpu_custom_call.1
$region0: #{tpu_custom_call.1}
  #allocation0 [shape = 'u32[]', space=smem, size = 0x4, offset = 0x4, fixed_abs, tag = 'smem constant byte address 0x4 - core index']
  #allocation1 [shape = 'u32[144,128]{1,0:T(1,128)}', space=vmem, size = 0x12000, scoped, tag = 'internal scratch']
  %s0 = inlined_call_operand.vmem [shape: f32[2,8,256], index: 0, kind: input, shape index: {}]
  %s1 = inlined_call_operand.vmem [shape: bf16[2,256,8], index: 1, kind: input, shape index: {}]
  %s2 = inlined_call_operand.vmem [shape: bf16[2,8,256], index: 2, kind: input, shape index: {}]
  %s3 = inlined_call_operand.hbm [shape: f32[2,16,256], index: 3, kind: output, shape index: {}]
  %s4 = sld [smem:[#allocation0]]
  $region45: #{tpu_custom_call.1} parent=0
    _
  %s6 = ssub.s32 1, %s4
  %s7 = scalar_select 0, %s6, %s4
  $region1: #{tpu_custom_call.1} parent=0
    #allocation2 [shape = 'u8[16384]{0}', space=vmem, size = 0x4000, scoped, tag = 'output window, operand 0']
    #allocation3 [shape = 's32[2]{0}', space=sflag, size = 0x8, scoped, tag = 'scoped memory for tpu_custom_call.1']
    %8 = vsyncpa [#allocation3], 0
    %s9 = scalar_lea.sflag [#allocation3], 1
    %10 = vsyncpa %s9, 0
    loop: start=0, step=1, limit=6
    $region2: #{tpu_custom_call.1} parent=1 // loop_pre_header
      _
    $region3: #{tpu_custom_call.1} parent=1 // loop_header
      %s12 = sphi 0, %s16
      %p13 = scmp.ge.s32.totalorder %s12, 6
      %s19 = sphi 0, %s31
      %s20 = sphi 0, %s27
      %s21 = sphi 0, %s19
      %s22 = sphi 0, %s20
      %s23 = sphi 0, %s21
      %s24 = sphi 0, %s22
      %s36 = sphi 0, %s38
      %s39 = sphi 0, %s36
      %s40 = sphi 0, %s39
      %s56 = sphi 0, %s40
      %s62 = sphi 0, %s64
      %s65 = sphi 0, %s62
      %s66 = sphi 0, %s65
      %s82 = sphi 0, %s66
      %s88 = sphi 0, %s90
      %s91 = sphi 0, %s88
      %s92 = sphi 0, %s91
      %s108 = sphi 0, %s92
      %s116 = sphi 0, %s118
      %s119 = sphi 0, %s116
      %s120 = sphi 0, %s119
      %s136 = sphi 0, %s120
    $region4: #{tpu_custom_call.1} parent=1 // loop_header_branch
      %15 = sbr.rel (%p13) target = $region8
    $region5: #{tpu_custom_call.1} parent=1 // loop_body
      %s17 = ssub.s32 %s12, 1
      %s18 = ssub.s32 %s12, 2
      %s25 = sadd.s32 1, %s20
      %p26 = scmp.ge.s32.totalorder %s25, 2
      %s27 = scalar_select %p26, 0, %s25
      %s28 = sadd.s32 1, %s19
      %s29 = scalar_select %p26, %s28, %s19
      %p30 = scmp.ge.s32.totalorder %s29, 2
      %s31 = scalar_select %p30, 0, %s29
      %s32 = ssub.s32 %s19, %s31
      %s33 = ssub.s32 %s20, %s27
      %s34 = sor.u32 %s32, %s33
      %p35 = scmp.eq.s32.totalorder %s34, 0
      %s37 = sadd.s32 %s36, 1
      %s38 = scalar_select %p35, %s36, %s37
      %p41 = pneg %p35
      %p42 = scmp.eq.s32.totalorder %s12, 3
      %p43 = por %p41, %p42
      %p44 = scmp.ne.s32.totalorder %s36, %s39
      %p45 = scmp.eq.s32.totalorder %s12, 0
      %p46 = por %p44, %p45
      %p47 = scmp.ne.s32.totalorder %s36, %s39
      %p48 = scmp.eq.s32.totalorder %s17, 3
      %p49 = por %p47, %p48
      %p50 = scmp.ne.s32.totalorder %s39, %s40
      %p51 = scmp.eq.s32.totalorder %s17, 0
      %p52 = por %p50, %p51
      %p53 = scmp.ne.s32.totalorder %s39, %s40
      %p54 = scmp.eq.s32.totalorder %s18, 3
      %p55 = por %p53, %p54
      %p57 = scmp.ne.s32.totalorder %s40, %s56
      %p58 = scmp.eq.s32.totalorder %s18, 0
      %p59 = por %p57, %p58
      %s60 = ssub.s32 %s19, %s31
      %p61 = scmp.eq.s32.totalorder %s60, 0
      %s63 = sadd.s32 %s62, 1
      %s64 = scalar_select %p61, %s62, %s63
      %p67 = pneg %p61
      %p68 = scmp.eq.s32.totalorder %s12, 3
      %p69 = por %p67, %p68
      %p70 = scmp.ne.s32.totalorder %s62, %s65
      %p71 = scmp.eq.s32.totalorder %s12, 0
      %p72 = por %p70, %p71
      %p73 = scmp.ne.s32.totalorder %s62, %s65
      %p74 = scmp.eq.s32.totalorder %s17, 3
      %p75 = por %p73, %p74
      %p76 = scmp.ne.s32.totalorder %s65, %s66
      %p77 = scmp.eq.s32.totalorder %s17, 0
      %p78 = por %p76, %p77
      %p79 = scmp.ne.s32.totalorder %s65, %s66
      %p80 = scmp.eq.s32.totalorder %s18, 3
      %p81 = por %p79, %p80
      %p83 = scmp.ne.s32.totalorder %s66, %s82
      %p84 = scmp.eq.s32.totalorder %s18, 0
      %p85 = por %p83, %p84
      %s86 = ssub.s32 %s19, %s31
      %p87 = scmp.eq.s32.totalorder %s86, 0
      %s89 = sadd.s32 %s88, 1
      %s90 = scalar_select %p87, %s88, %s89
      %p93 = pneg %p87
      %p94 = scmp.eq.s32.totalorder %s12, 3
      %p95 = por %p93, %p94
      %p96 = scmp.ne.s32.totalorder %s88, %s91
      %p97 = scmp.eq.s32.totalorder %s12, 0
      %p98 = por %p96, %p97
      %p99 = scmp.ne.s32.totalorder %s88, %s91
      %p100 = scmp.eq.s32.totalorder %s17, 3
      %p101 = por %p99, %p100
      %p102 = scmp.ne.s32.totalorder %s91, %s92
      %p103 = scmp.eq.s32.totalorder %s17, 0
      %p104 = por %p102, %p103
      %p105 = scmp.ne.s32.totalorder %s91, %s92
      %p106 = scmp.eq.s32.totalorder %s18, 3
      %p107 = por %p105, %p106
      %p109 = scmp.ne.s32.totalorder %s92, %s108
      %p110 = scmp.eq.s32.totalorder %s18, 0
      %p111 = por %p109, %p110
      %s112 = ssub.s32 %s19, %s31
      %s113 = ssub.s32 %s20, %s27
      %s114 = sor.u32 %s112, %s113
      %p115 = scmp.eq.s32.totalorder %s114, 0
      %s117 = sadd.s32 %s116, 1
      %s118 = scalar_select %p115, %s116, %s117
      %p121 = pneg %p115
      %p122 = scmp.eq.s32.totalorder %s12, 3
      %p123 = por %p121, %p122
      %p124 = scmp.ne.s32.totalorder %s116, %s119
      %p125 = scmp.eq.s32.totalorder %s12, 0
      %p126 = por %p124, %p125
      %p127 = scmp.ne.s32.totalorder %s116, %s119
      %p128 = scmp.eq.s32.totalorder %s17, 3
      %p129 = por %p127, %p128
      %p130 = scmp.ne.s32.totalorder %s119, %s120
      %p131 = scmp.eq.s32.totalorder %s17, 0
      %p132 = por %p130, %p131
      %p133 = scmp.ne.s32.totalorder %s119, %s120
      %p134 = scmp.eq.s32.totalorder %s18, 3
      %p135 = por %p133, %p134
      %p137 = scmp.ne.s32.totalorder %s120, %s136
      %p138 = scmp.eq.s32.totalorder %s18, 0
      %p139 = por %p137, %p138
      %p140 = scmp.le.s32.totalorder 1, %s12
      %p141 = scmp.lt.s32.totalorder %s12, 5
      %p142 = pnand %p140, %p141
      %p143 = pneg %p142
      // Predicated region
      $region9: #{tpu_custom_call.1} parent=5 // pred_check
        _
      $region10: #{tpu_custom_call.1} parent=5 // pred_check_branch
        %145 = sbr.rel (%p142) target = $region12
      $region11: #{tpu_custom_call.1} parent=5 // pred_region
        %s146 = ssub.s32 %s12, 1
      $region12: #{tpu_custom_call.1} parent=5 // pred_fallthru
        _
      %p147 = scmp.lt.s32.totalorder %s12, 4
      // Predicated region
      $region13: #{tpu_custom_call.1} parent=5 // pred_check
        %p148 = pneg %p147
      $region14: #{tpu_custom_call.1} parent=5 // pred_check_branch
        %150 = sbr.rel (%p148) target = $region16
      $region15: #{tpu_custom_call.1} parent=5 // pred_region
        // Predicated region
        $region17: #{tpu_custom_call.1} parent=15 // pred_check
          %p151 = pneg %p46
        $region18: #{tpu_custom_call.1} parent=15 // pred_check_branch
          %153 = sbr.rel (%p151) target = $region20
        $region19: #{tpu_custom_call.1} parent=15 // pred_region
          %p154 = scmp.lt.s32.totalorder %s19, 1
          %s155 = scalar_select %p154, %s19, 1
          %p156 = scmp.lt.s32.totalorder %s20, 1
          %s157 = scalar_select %p156, %s20, 1
          %s158 = smul.addr %s155, 2
          %s159 = sadd.s32 %s157, %s158
          %s160 = smul.addr %s159, 8
          %s161 = scalar_lea.vmem %s0, %s160
        $region20: #{tpu_custom_call.1} parent=15 // pred_fallthru
          _
        // Predicated region
        $region21: #{tpu_custom_call.1} parent=15 // pred_check
          %p162 = pneg %p72
        $region22: #{tpu_custom_call.1} parent=15 // pred_check_branch
          %164 = sbr.rel (%p162) target = $region24
        $region23: #{tpu_custom_call.1} parent=15 // pred_region
          %p165 = scmp.lt.s32.totalorder %s19, 1
          %s166 = scalar_select %p165, %s19, 1
          %s167 = smul.addr %s166, 32
          %s168 = smul.addr %s167, 4
          %s169 = scalar_lea.vmem %s1, %s168
        $region24: #{tpu_custom_call.1} parent=15 // pred_fallthru
          _
        // Predicated region
        $region25: #{tpu_custom_call.1} parent=15 // pred_check
          %p170 = pneg %p98
        $region26: #{tpu_custom_call.1} parent=15 // pred_check_branch
          %172 = sbr.rel (%p170) target = $region28
        $region27: #{tpu_custom_call.1} parent=15 // pred_region
          %p173 = scmp.lt.s32.totalorder %s19, 1
          %s174 = scalar_select %p173, %s19, 1
          %s175 = smul.addr %s174, 2
          %s176 = smul.addr %s175, 4
          %s177 = scalar_lea.vmem %s2, %s176
        $region28: #{tpu_custom_call.1} parent=15 // pred_fallthru
          _
      $region16: #{tpu_custom_call.1} parent=5 // pred_fallthru
        _
      %p178 = scmp.le.s32.totalorder 1, %s12
      %p179 = scmp.lt.s32.totalorder %s12, 5
      %p180 = pnand %p178, %p179
      %p181 = pneg %p180
      // Predicated region
      $region29: #{tpu_custom_call.1} parent=5 // pred_check
        _
      $region30: #{tpu_custom_call.1} parent=5 // pred_check_branch
        %183 = sbr.rel (%p180) target = $region32
      $region31: #{tpu_custom_call.1} parent=5 // pred_region
        %s184 = ssub.s32 %s12, 1
        %p185 = scmp.lt.s32.totalorder %s21, 1
        %s186 = scalar_select %p185, %s21, 1
        %p187 = scmp.lt.s32.totalorder %s22, 1
        %s188 = scalar_select %p187, %s22, 1
        %s189 = smul.addr %s186, 2
        %s190 = sadd.s32 %s188, %s189
        %s191 = smul.addr %s190, 8
        %s192 = scalar_lea.vmem %s0, %s191
        %p193 = pneg %p52
        %p194 = pneg %p49
        %p195 = scmp.lt.s32.totalorder %s21, 1
        %s196 = scalar_select %p195, %s21, 1
        %s197 = smul.addr %s196, 32
        %s198 = smul.addr %s197, 4
        %s199 = scalar_lea.vmem %s1, %s198
        %p200 = pneg %p78
        %p201 = pneg %p75
        %p202 = scmp.lt.s32.totalorder %s21, 1
        %s203 = scalar_select %p202, %s21, 1
        %s204 = smul.addr %s203, 2
        %s205 = smul.addr %s204, 4
        %s206 = scalar_lea.vmem %s2, %s205
        %p207 = pneg %p104
        %p208 = pneg %p101
        %p209 = pneg %p132
        %p210 = pneg %p129
        %s211 = sand.u32 %s119, 1
        %s212 = scalar_lea.sflag [#allocation3], %s211
        %s213 = sand.u32 %s119, 1
        %s214 = smul.addr %s213, 16
        %s215 = scalar_lea.vmem [#allocation2], %s214
        %p216 = scmp.lt.s32.totalorder %s21, 1
        %s217 = scalar_select %p216, %s21, 1
        %p218 = scmp.lt.s32.totalorder %s22, 1
        %s219 = scalar_select %p218, %s22, 1
        %s220 = smul.addr %s217, 2
        %s221 = sadd.s32 %s219, %s220
        %s222 = smul.addr %s221, 8
        %s223 = scalar_lea.vmem %s0, %s222
        %p224 = scmp.lt.s32.totalorder %s21, 1
        %s225 = scalar_select %p224, %s21, 1
        %s226 = smul.addr %s225, 32
        %s227 = smul.addr %s226, 4
        %s228 = scalar_lea.vmem %s1, %s227
        %p229 = scmp.lt.s32.totalorder %s21, 1
        %s230 = scalar_select %p229, %s21, 1
        %s231 = smul.addr %s230, 2
        %s232 = smul.addr %s231, 4
        %s233 = scalar_lea.vmem %s2, %s232
        %v235 = vld [vmem:[%s223] sm:$0xff]
        %v236 = vpack.c.bf16 %v235, %v235
        %v237 = vld [vmem:[%s228] sm:$0xf]
        %v238 = vld [vmem:[%s228 + $0x4] sm:$0xf]
        %v239 = vld [vmem:[%s228 + $0x8] sm:$0xf]
        %v240 = vld [vmem:[%s228 + $0xc] sm:$0xf]
        %v241 = vld [vmem:[%s228 + $0x10] sm:$0xf]
        %v242 = vld [vmem:[%s228 + $0x14] sm:$0xf]
        %v243 = vld [vmem:[%s228 + $0x18] sm:$0xf]
        %v244 = vld [vmem:[%s228 + $0x1c] sm:$0xf]
        %v245 = vld [vmem:[%s228 + $0x20] sm:$0xf]
        %v246 = vld [vmem:[%s228 + $0x24] sm:$0xf]
        %v247 = vld [vmem:[%s228 + $0x28] sm:$0xf]
        %v248 = vld [vmem:[%s228 + $0x2c] sm:$0xf]
        %v249 = vld [vmem:[%s228 + $0x30] sm:$0xf]
        %v250 = vld [vmem:[%s228 + $0x34] sm:$0xf]
        %v251 = vld [vmem:[%s228 + $0x38] sm:$0xf]
        %v252 = vld [vmem:[%s228 + $0x3c] sm:$0xf]
        %v253 = vld [vmem:[%s228 + $0x40] sm:$0xf]
        %v254 = vld [vmem:[%s228 + $0x44] sm:$0xf]
        %v255 = vld [vmem:[%s228 + $0x48] sm:$0xf]
        %v256 = vld [vmem:[%s228 + $0x4c] sm:$0xf]
        %v257 = vld [vmem:[%s228 + $0x50] sm:$0xf]
        %v258 = vld [vmem:[%s228 + $0x54] sm:$0xf]
        %v259 = vld [vmem:[%s228 + $0x58] sm:$0xf]
        %v260 = vld [vmem:[%s228 + $0x5c] sm:$0xf]
        %v261 = vld [vmem:[%s228 + $0x60] sm:$0xf]
        %v262 = vld [vmem:[%s228 + $0x64] sm:$0xf]
        %v263 = vld [vmem:[%s228 + $0x68] sm:$0xf]
        %v264 = vld [vmem:[%s228 + $0x6c] sm:$0xf]
        %v265 = vld [vmem:[%s228 + $0x70] sm:$0xf]
        %v266 = vld [vmem:[%s228 + $0x74] sm:$0xf]
        %v267 = vld [vmem:[%s228 + $0x78] sm:$0xf]
        %v268 = vld [vmem:[%s228 + $0x7c] sm:$0xf]
        %v301 = vunpack.c.l.b16 %v237
        %v302 = vunpack.c.l.b16 %v238
        %v303 = vunpack.c.l.b16 %v239
        %v304 = vunpack.c.l.b16 %v240
        %v305 = vunpack.c.l.b16 %v241
        %v306 = vunpack.c.l.b16 %v242
        %v307 = vunpack.c.l.b16 %v243
        %v308 = vunpack.c.l.b16 %v244
        %v309 = vunpack.c.l.b16 %v245
        %v310 = vunpack.c.l.b16 %v246
        %v311 = vunpack.c.l.b16 %v247
        %v312 = vunpack.c.l.b16 %v248
        %v313 = vunpack.c.l.b16 %v249
        %v314 = vunpack.c.l.b16 %v250
        %v315 = vunpack.c.l.b16 %v251
        %v316 = vunpack.c.l.b16 %v252
        %v317 = vunpack.c.l.b16 %v253
        %v318 = vunpack.c.l.b16 %v254
        %v319 = vunpack.c.l.b16 %v255
        %v320 = vunpack.c.l.b16 %v256
        %v321 = vunpack.c.l.b16 %v257
        %v322 = vunpack.c.l.b16 %v258
        %v323 = vunpack.c.l.b16 %v259
        %v324 = vunpack.c.l.b16 %v260
        %v325 = vunpack.c.l.b16 %v261
        %v326 = vunpack.c.l.b16 %v262
        %v327 = vunpack.c.l.b16 %v263
        %v328 = vunpack.c.l.b16 %v264
        %v329 = vunpack.c.l.b16 %v265
        %v330 = vunpack.c.l.b16 %v266
        %v331 = vunpack.c.l.b16 %v267
        %v332 = vunpack.c.l.b16 %v268
        %v333 = vpack.c.b16 %v302, %v301
        %v334 = vpack.c.b16 %v304, %v303
        %v335 = vpack.c.b16 %v306, %v305
        %v336 = vpack.c.b16 %v308, %v307
        %v337 = vpack.c.b16 %v310, %v309
        %v338 = vpack.c.b16 %v312, %v311
        %v339 = vpack.c.b16 %v314, %v313
        %v340 = vpack.c.b16 %v316, %v315
        %v341 = vpack.c.b16 %v318, %v317
        %v342 = vpack.c.b16 %v320, %v319
        %v343 = vpack.c.b16 %v322, %v321
        %v344 = vpack.c.b16 %v324, %v323
        %v345 = vpack.c.b16 %v326, %v325
        %v346 = vpack.c.b16 %v328, %v327
        %v347 = vpack.c.b16 %v330, %v329
        %v348 = vpack.c.b16 %v332, %v331
        %vm349 = vcmask 64512
        %v351 = vsel %vm349, %v333, 0
        %v354 = vsel %vm349, %v334, 0
        %v357 = vsel %vm349, %v335, 0
        %v360 = vsel %vm349, %v336, 0
        %v363 = vsel %vm349, %v337, 0
        %v366 = vsel %vm349, %v338, 0
        %v369 = vsel %vm349, %v339, 0
        %v372 = vsel %vm349, %v340, 0
        %v375 = vsel %vm349, %v341, 0
        %v378 = vsel %vm349, %v342, 0
        %v381 = vsel %vm349, %v343, 0
        %v384 = vsel %vm349, %v344, 0
        %v387 = vsel %vm349, %v345, 0
        %v390 = vsel %vm349, %v346, 0
        %v393 = vsel %vm349, %v347, 0
        %v396 = vsel %vm349, %v348, 0
        %vm398 = vcmask 1043456
        %v400 = vsel %vm398, %v236, 0
        %402 = vmatprep.subr.bf16.mxu0 0
        %403 = vmatpush1.bf16.msra.mxu0 0
        %404 = vmatprep.subr.bf16.mxu0 0
        %405 = vmatpush1.bf16.msra.mxu0 0
        %406 = vmatprep.subr.bf16.mxu0 0
        %407 = vmatpush1.bf16.msra.mxu0 0
        %408 = vmatprep.subr.bf16.mxu0 0
        %409 = vmatpush1.bf16.msra.mxu0 0
        %410 = vmatprep.subr.bf16.mxu0 0
        %411 = vmatpush1.bf16.msra.mxu0 0
        %412 = vmatprep.subr.bf16.mxu0 0
        %413 = vmatpush1.bf16.msra.mxu0 0
        %414 = vmatprep.subr.bf16.mxu0 0
        %415 = vmatpush1.bf16.msra.mxu0 0
        %416 = vmatprep.subr.bf16.mxu0 0
        %417 = vmatpush1.bf16.msra.mxu0 %v400
        %418 = vmatprep.subr.bf16.mxu0 0
        %419 = vmatpush2.bf16.msra.mxu0 0
        %420 = vmatprep.subr.bf16.mxu0 0
        %421 = vmatpush2.bf16.msra.mxu0 0
        %422 = vmatprep.subr.bf16.mxu0 0
        %423 = vmatpush2.bf16.msra.mxu0 0
        %424 = vmatprep.subr.bf16.mxu0 0
        %425 = vmatpush2.bf16.msra.mxu0 0
        %426 = vmatprep.subr.bf16.mxu0 0
        %427 = vmatpush2.bf16.msra.mxu0 0
        %428 = vmatprep.subr.bf16.mxu0 0
        %429 = vmatpush2.bf16.msra.mxu0 0
        %430 = vmatprep.subr.bf16.mxu0 0
        %431 = vmatpush2.bf16.msra.mxu0 0
        %432 = vmatprep.subr.bf16.mxu0 0
        %433 = vmatpush2.bf16.msra.mxu0 0
        %434 = vmatprep.mubr.bf16.mxu0 0
        %435 = vmatmul.mubr.bf16.gmra.mxu0 %v351
        %v436 = vpop.f32.mrf.mxu0
        %v437 = vadd.f32 0.0, %v436
        %v438 = vpop.f32.mrf.mxu0
        %v439 = vpop.f32.mrf.mxu0
        %v440 = vadd.f32 0.0, %v439
        %v441 = vpop.f32.mrf.mxu0
        %442 = vmatprep.mubr.bf16.mxu0 0
        %443 = vmatmul.mubr.bf16.gmra.mxu0 %v354
        %v444 = vpop.f32.mrf.mxu0
        %v445 = vadd.f32 0.0, %v444
        %v446 = vpop.f32.mrf.mxu0
        %v447 = vpop.f32.mrf.mxu0
        %v448 = vadd.f32 0.0, %v447
        %v449 = vpop.f32.mrf.mxu0
        %450 = vmatprep.mubr.bf16.mxu0 0
        %451 = vmatmul.mubr.bf16.gmra.mxu0 %v357
        %v452 = vpop.f32.mrf.mxu0
        %v453 = vadd.f32 0.0, %v452
        %v454 = vpop.f32.mrf.mxu0
        %v455 = vpop.f32.mrf.mxu0
        %v456 = vadd.f32 0.0, %v455
        %v457 = vpop.f32.mrf.mxu0
        %458 = vmatprep.mubr.bf16.mxu0 0
        %459 = vmatmul.mubr.bf16.gmra.mxu0 %v360
        %v460 = vpop.f32.mrf.mxu0
        %v461 = vadd.f32 0.0, %v460
        %v462 = vpop.f32.mrf.mxu0
        %v463 = vpop.f32.mrf.mxu0
        %v464 = vadd.f32 0.0, %v463
        %v465 = vpop.f32.mrf.mxu0
        %466 = vmatprep.mubr.bf16.mxu0 0
        %467 = vmatmul.mubr.bf16.gmra.mxu0 %v363
        %v468 = vpop.f32.mrf.mxu0
        %v469 = vadd.f32 0.0, %v468
        %v470 = vpop.f32.mrf.mxu0
        %v471 = vpop.f32.mrf.mxu0
        %v472 = vadd.f32 0.0, %v471
        %v473 = vpop.f32.mrf.mxu0
        %474 = vmatprep.mubr.bf16.mxu0 0
        %475 = vmatmul.mubr.bf16.gmra.mxu0 %v366
        %v476 = vpop.f32.mrf.mxu0
        %v477 = vadd.f32 0.0, %v476
        %v478 = vpop.f32.mrf.mxu0
        %v479 = vpop.f32.mrf.mxu0
        %v480 = vadd.f32 0.0, %v479
        %v481 = vpop.f32.mrf.mxu0
        %482 = vmatprep.mubr.bf16.mxu0 0
        %483 = vmatmul.mubr.bf16.gmra.mxu0 %v369
        %v484 = vpop.f32.mrf.mxu0
        %v485 = vadd.f32 0.0, %v484
        %v486 = vpop.f32.mrf.mxu0
        %v487 = vpop.f32.mrf.mxu0
        %v488 = vadd.f32 0.0, %v487
        %v489 = vpop.f32.mrf.mxu0
        %490 = vmatprep.mubr.bf16.mxu0 0
        %491 = vmatmul.mubr.bf16.gmra.mxu0 %v372
        %v492 = vpop.f32.mrf.mxu0
        %v493 = vadd.f32 0.0, %v492
        %v494 = vpop.f32.mrf.mxu0
        %v495 = vpop.f32.mrf.mxu0
        %v496 = vadd.f32 0.0, %v495
        %v497 = vpop.f32.mrf.mxu0
        %498 = vmatprep.mubr.bf16.mxu0 0
        %499 = vmatmul.mubr.bf16.gmra.mxu0 %v375
        %v500 = vpop.f32.mrf.mxu0
        %v501 = vadd.f32 0.0, %v500
        %v502 = vpop.f32.mrf.mxu0
        %v503 = vpop.f32.mrf.mxu0
        %v504 = vadd.f32 0.0, %v503
        %v505 = vpop.f32.mrf.mxu0
        %506 = vmatprep.mubr.bf16.mxu0 0
        %507 = vmatmul.mubr.bf16.gmra.mxu0 %v378
        %v508 = vpop.f32.mrf.mxu0
        %v509 = vadd.f32 0.0, %v508
        %v510 = vpop.f32.mrf.mxu0
        %v511 = vpop.f32.mrf.mxu0
        %v512 = vadd.f32 0.0, %v511
        %v513 = vpop.f32.mrf.mxu0
        %514 = vmatprep.mubr.bf16.mxu0 0
        %515 = vmatmul.mubr.bf16.gmra.mxu0 %v381
        %v516 = vpop.f32.mrf.mxu0
        %v517 = vadd.f32 0.0, %v516
        %v518 = vpop.f32.mrf.mxu0
        %v519 = vpop.f32.mrf.mxu0
        %v520 = vadd.f32 0.0, %v519
        %v521 = vpop.f32.mrf.mxu0
        %522 = vmatprep.mubr.bf16.mxu0 0
        %523 = vmatmul.mubr.bf16.gmra.mxu0 %v384
        %v524 = vpop.f32.mrf.mxu0
        %v525 = vadd.f32 0.0, %v524
        %v526 = vpop.f32.mrf.mxu0
        %v527 = vpop.f32.mrf.mxu0
        %v528 = vadd.f32 0.0, %v527
        %v529 = vpop.f32.mrf.mxu0
        %530 = vmatprep.mubr.bf16.mxu0 0
        %531 = vmatmul.mubr.bf16.gmra.mxu0 %v387
        %v532 = vpop.f32.mrf.mxu0
        %v533 = vadd.f32 0.0, %v532
        %v534 = vpop.f32.mrf.mxu0
        %v535 = vpop.f32.mrf.mxu0
        %v536 = vadd.f32 0.0, %v535
        %v537 = vpop.f32.mrf.mxu0
        %538 = vmatprep.mubr.bf16.mxu0 0
        %539 = vmatmul.mubr.bf16.gmra.mxu0 %v390
        %v540 = vpop.f32.mrf.mxu0
        %v541 = vadd.f32 0.0, %v540
        %v542 = vpop.f32.mrf.mxu0
        %v543 = vpop.f32.mrf.mxu0
        %v544 = vadd.f32 0.0, %v543
        %v545 = vpop.f32.mrf.mxu0
        %546 = vmatprep.mubr.bf16.mxu0 0
        %547 = vmatmul.mubr.bf16.gmra.mxu0 %v393
        %v548 = vpop.f32.mrf.mxu0
        %v549 = vadd.f32 0.0, %v548
        %v550 = vpop.f32.mrf.mxu0
        %v551 = vpop.f32.mrf.mxu0
        %v552 = vadd.f32 0.0, %v551
        %v553 = vpop.f32.mrf.mxu0
        %554 = vmatprep.mubr.bf16.mxu0 0
        %555 = vmatmul.mubr.bf16.gmra.mxu0 %v396
        %v556 = vpop.f32.mrf.mxu0
        %v557 = vadd.f32 0.0, %v556
        %v558 = vpop.f32.mrf.mxu0
        %v559 = vpop.f32.mrf.mxu0
        %v560 = vadd.f32 0.0, %v559
        %v561 = vpop.f32.mrf.mxu0
        %562 = vdwg.mxu0
        %v563 = vmax.f32 %v437, %v453
        %v564 = vmax.f32 %v440, %v456
        %v565 = vmax.f32 %v445, %v461
        %v566 = vmax.f32 %v448, %v464
        %v567 = vmax.f32 %v563, %v469
        %v568 = vmax.f32 %v564, %v472
        %v569 = vmax.f32 %v565, %v477
        %v570 = vmax.f32 %v566, %v480
        %v571 = vmax.f32 %v567, %v485
        %v572 = vmax.f32 %v568, %v488
        %v573 = vmax.f32 %v569, %v493
        %v574 = vmax.f32 %v570, %v496
        %v575 = vmax.f32 %v571, %v501
        %v576 = vmax.f32 %v572, %v504
        %v577 = vmax.f32 %v573, %v509
        %v578 = vmax.f32 %v574, %v512
        %v579 = vmax.f32 %v575, %v517
        %v580 = vmax.f32 %v576, %v520
        %v581 = vmax.f32 %v577, %v525
        %v582 = vmax.f32 %v578, %v528
        %v583 = vmax.f32 %v579, %v533
        %v584 = vmax.f32 %v580, %v536
        %v585 = vmax.f32 %v581, %v541
        %v586 = vmax.f32 %v582, %v544
        %v587 = vmax.f32 %v583, %v549
        %v588 = vmax.f32 %v584, %v552
        %v589 = vmax.f32 %v585, %v557
        %v590 = vmax.f32 %v586, %v560
        %v591 = vmax.f32 %v587, %v588
        %v592 = vmax.f32 %v589, %v590
        %v593 = vmax.f32 %v591, %v592
        %v594 = vrot.slane %v593, 4
        %v595 = vmax.f32 %v593, %v594
        %v596 = vrot.slane %v595, 2
        %v597 = vmax.f32 %v595, %v596
        %v598 = vrot.slane %v597, 1
        %v599 = vmax.f32 %v597, %v598
        %v600 = vsub.f32 %v437, %v599
        %v601 = vsub.f32 %v440, %v599
        %v602 = vsub.f32 %v445, %v599
        %v603 = vsub.f32 %v448, %v599
        %v604 = vsub.f32 %v453, %v599
        %v605 = vsub.f32 %v456, %v599
        %v606 = vsub.f32 %v461, %v599
        %v607 = vsub.f32 %v464, %v599
        %v608 = vsub.f32 %v469, %v599
        %v609 = vsub.f32 %v472, %v599
        %v610 = vsub.f32 %v477, %v599
        %v611 = vsub.f32 %v480, %v599
        %v612 = vsub.f32 %v485, %v599
        %v613 = vsub.f32 %v488, %v599
        %v614 = vsub.f32 %v493, %v599
        %v615 = vsub.f32 %v496, %v599
        %v616 = vsub.f32 %v501, %v599
        %v617 = vsub.f32 %v504, %v599
        %v618 = vsub.f32 %v509, %v599
        %v619 = vsub.f32 %v512, %v599
        %v620 = vsub.f32 %v517, %v599
        %v621 = vsub.f32 %v520, %v599
        %v622 = vsub.f32 %v525, %v599
        %v623 = vsub.f32 %v528, %v599
        %v624 = vsub.f32 %v533, %v599
        %v625 = vsub.f32 %v536, %v599
        %v626 = vsub.f32 %v541, %v599
        %v627 = vsub.f32 %v544, %v599
        %v628 = vsub.f32 %v549, %v599
        %v629 = vsub.f32 %v552, %v599
        %v630 = vsub.f32 %v557, %v599
        %v631 = vsub.f32 %v560, %v599
        %v632 = vmul.f32 %v600, 1.442695
        %v633 = vpow.pop %v632
        %v634 = vmul.f32 %v601, 1.442695
        %v635 = vpow.pop %v634
        %v636 = vmul.f32 %v602, 1.442695
        %v637 = vpow.pop %v636
        %v638 = vmul.f32 %v603, 1.442695
        %v639 = vpow.pop %v638
        %v640 = vmul.f32 %v604, 1.442695
        %v641 = vpow.pop %v640
        %v642 = vmul.f32 %v605, 1.442695
        %v643 = vpow.pop %v642
        %v644 = vmul.f32 %v606, 1.442695
        %v645 = vpow.pop %v644
        %v646 = vmul.f32 %v607, 1.442695
        %v647 = vpow.pop %v646
        %v648 = vmul.f32 %v608, 1.442695
        %v649 = vpow.pop %v648
        %v650 = vmul.f32 %v609, 1.442695
        %v651 = vpow.pop %v650
        %v652 = vmul.f32 %v610, 1.442695
        %v653 = vpow.pop %v652
        %v654 = vmul.f32 %v611, 1.442695
        %v655 = vpow.pop %v654
        %v656 = vmul.f32 %v612, 1.442695
        %v657 = vpow.pop %v656
        %v658 = vmul.f32 %v613, 1.442695
        %v659 = vpow.pop %v658
        %v660 = vmul.f32 %v614, 1.442695
        %v661 = vpow.pop %v660
        %v662 = vmul.f32 %v615, 1.442695
        %v663 = vpow.pop %v662
        %v664 = vmul.f32 %v616, 1.442695
        %v665 = vpow.pop %v664
        %v666 = vmul.f32 %v617, 1.442695
        %v667 = vpow.pop %v666
        %v668 = vmul.f32 %v618, 1.442695
        %v669 = vpow.pop %v668
        %v670 = vmul.f32 %v619, 1.442695
        %v671 = vpow.pop %v670
        %v672 = vmul.f32 %v620, 1.442695
        %v673 = vpow.pop %v672
        %v674 = vmul.f32 %v621, 1.442695
        %v675 = vpow.pop %v674
        %v676 = vmul.f32 %v622, 1.442695
        %v677 = vpow.pop %v676
        %v678 = vmul.f32 %v623, 1.442695
        %v679 = vpow.pop %v678
        %v680 = vmul.f32 %v624, 1.442695
        %v681 = vpow.pop %v680
        %v682 = vmul.f32 %v625, 1.442695
        %v683 = vpow.pop %v682
        %v684 = vmul.f32 %v626, 1.442695
        %v685 = vpow.pop %v684
        %v686 = vmul.f32 %v627, 1.442695
        %v687 = vpow.pop %v686
        %v688 = vmul.f32 %v628, 1.442695
        %v689 = vpow.pop %v688
        %v690 = vmul.f32 %v629, 1.442695
        %v691 = vpow.pop %v690
        %v692 = vmul.f32 %v630, 1.442695
        %v693 = vpow.pop %v692
        %v694 = vmul.f32 %v631, 1.442695
        %v695 = vpow.pop %v694
        %v696 = vadd.f32 %v633, %v635
        %v697 = vadd.f32 %v696, %v637
        %v698 = vadd.f32 %v697, %v639
        %v699 = vadd.f32 %v698, %v641
        %v700 = vadd.f32 %v699, %v643
        %v701 = vadd.f32 %v700, %v645
        %v702 = vadd.f32 %v701, %v647
        %v703 = vadd.f32 %v702, %v649
        %v704 = vadd.f32 %v703, %v651
        %v705 = vadd.f32 %v704, %v653
        %v706 = vadd.f32 %v705, %v655
        %v707 = vadd.f32 %v706, %v657
        %v708 = vadd.f32 %v707, %v659
        %v709 = vadd.f32 %v708, %v661
        %v710 = vadd.f32 %v709, %v663
        %v711 = vadd.f32 %v710, %v665
        %v712 = vadd.f32 %v711, %v667
        %v713 = vadd.f32 %v712, %v669
        %v714 = vadd.f32 %v713, %v671
        %v715 = vadd.f32 %v714, %v673
        %v716 = vadd.f32 %v715, %v675
        %v717 = vadd.f32 %v716, %v677
        %v718 = vadd.f32 %v717, %v679
        %v719 = vadd.f32 %v718, %v681
        %v720 = vadd.f32 %v719, %v683
        %v721 = vadd.f32 %v720, %v685
        %v722 = vadd.f32 %v721, %v687
        %v723 = vadd.f32 %v722, %v689
        %v724 = vadd.f32 %v723, %v691
        %v725 = vadd.f32 %v724, %v693
        %v726 = vadd.f32 %v725, %v695
        %v727 = vrot.slane %v726, 4
        %v728 = vadd.f32 %v726, %v727
        %v729 = vrot.slane %v728, 2
        %v730 = vadd.f32 %v728, %v729
        %v731 = vrot.slane %v730, 1
        %v732 = vadd.f32 %v730, %v731
        %v733 = vld [vmem:[%s233] sm:$0xff]
        %v734 = vpack.c.bf16 %v635, %v633
        %v735 = vpack.c.bf16 %v639, %v637
        %v736 = vpack.c.bf16 %v643, %v641
        %v737 = vpack.c.bf16 %v647, %v645
        %v738 = vpack.c.bf16 %v651, %v649
        %v739 = vpack.c.bf16 %v655, %v653
        %v740 = vpack.c.bf16 %v659, %v657
        %v741 = vpack.c.bf16 %v663, %v661
        %v742 = vpack.c.bf16 %v667, %v665
        %v743 = vpack.c.bf16 %v671, %v669
        %v744 = vpack.c.bf16 %v675, %v673
        %v745 = vpack.c.bf16 %v679, %v677
        %v746 = vpack.c.bf16 %v683, %v681
        %v747 = vpack.c.bf16 %v687, %v685
        %v748 = vpack.c.bf16 %v691, %v689
        %v749 = vpack.c.bf16 %v695, %v693
        %v751 = vunpack.c.l.b16 %v733
        %v752 = vunpack.c.h.b16 %v733
        %v753 = vpack.c.b16 %v751, %v751
        %v754 = vpack.c.b16 %v752, %v752
        %757 = vmatprep.subr.bf16.mxu0 0
        %758 = vmatpush1.bf16.msra.mxu0 %v741
        %759 = vmatprep.subr.bf16.mxu0 0
        %760 = vmatpush1.bf16.msra.mxu0 %v740
        %761 = vmatprep.subr.bf16.mxu0 0
        %762 = vmatpush1.bf16.msra.mxu0 %v739
        %763 = vmatprep.subr.bf16.mxu0 0
        %764 = vmatpush1.bf16.msra.mxu0 %v738
        %765 = vmatprep.subr.bf16.mxu0 0
        %766 = vmatpush1.bf16.msra.mxu0 %v737
        %767 = vmatprep.subr.bf16.mxu0 0
        %768 = vmatpush1.bf16.msra.mxu0 %v736
        %769 = vmatprep.subr.bf16.mxu0 0
        %770 = vmatpush1.bf16.msra.mxu0 %v735
        %771 = vmatprep.subr.bf16.mxu0 0
        %772 = vmatpush1.bf16.msra.mxu0 %v734
        %773 = vmatprep.subr.bf16.mxu0 0
        %774 = vmatpush2.bf16.msra.mxu0 %v749
        %775 = vmatprep.subr.bf16.mxu0 0
        %776 = vmatpush2.bf16.msra.mxu0 %v748
        %777 = vmatprep.subr.bf16.mxu0 0
        %778 = vmatpush2.bf16.msra.mxu0 %v747
        %779 = vmatprep.subr.bf16.mxu0 0
        %780 = vmatpush2.bf16.msra.mxu0 %v746
        %781 = vmatprep.subr.bf16.mxu0 0
        %782 = vmatpush2.bf16.msra.mxu0 %v745
        %783 = vmatprep.subr.bf16.mxu0 0
        %784 = vmatpush2.bf16.msra.mxu0 %v744
        %785 = vmatprep.subr.bf16.mxu0 0
        %786 = vmatpush2.bf16.msra.mxu0 %v743
        %787 = vmatprep.subr.bf16.mxu0 0
        %788 = vmatpush2.bf16.msra.mxu0 %v742
        %789 = vmatprep.mubr.bf16.mxu0 %v754
        %790 = vmatmul.mubr.bf16.gmra.mxu0 %v753
        %v791 = vpop.f32.mrf.mxu0
        %v792 = vadd.f32 0.0, %v791
        %v793 = vpop.f32.mrf.mxu0
        %v794 = vpop.f32.mrf.mxu0
        %v795 = vpop.f32.mrf.mxu0
        %796 = vdwg.mxu0
        %797 = vst [vmem:[%s215] sm:$0xff] %v235
        %v798 = vrcp.pop %v732
        %v799 = vmul.f32 %v792, %v798
        %800 = vst [vmem:[%s215 + $0x8] sm:$0xff] %v799
        %s801 = sand.u32 %s119, 1
        %s802 = scalar_lea.sflag [#allocation3], %s801
        %s803 = sand.u32 %s119, 1
        %s804 = smul.addr %s803, 16
        %s805 = scalar_lea.vmem [#allocation2], %s804
        // Predicated region
        $region33: #{tpu_custom_call.1} parent=31 // pred_check
          %p806 = pneg %p129
        $region34: #{tpu_custom_call.1} parent=31 // pred_check_branch
          %808 = sbr.rel (%p806) target = $region36
        $region35: #{tpu_custom_call.1} parent=31 // pred_region
          %s810 = ssub.s32 256, 256
          %811 = vsyncadd %s802, %s810
          %s812 = smul.addr %s21, 4
          %s813 = sadd.s32 %s22, %s812
          %s814 = smul.addr %s813, 128
          %s815 = scalar_lea.hbm %s3, %s814
          %s816 = sshll.u32 %s805, 4
          %s817 = int_to_ptr.vmem [resolvable:$true] %s816
          %822 = dma.vmem_to_hbm [thread:$0]  %s817, 256, %s815, %s802, 128, 256, 8
        $region36: #{tpu_custom_call.1} parent=31 // pred_fallthru
          _
      $region32: #{tpu_custom_call.1} parent=5 // pred_fallthru
        _
      %p823 = scmp.le.s32.totalorder 2, %s12
      // Predicated region
      $region37: #{tpu_custom_call.1} parent=5 // pred_check
        %p824 = pneg %p823
      $region38: #{tpu_custom_call.1} parent=5 // pred_check_branch
        %826 = sbr.rel (%p824) target = $region40
      $region39: #{tpu_custom_call.1} parent=5 // pred_region
        %s827 = ssub.s32 %s12, 2
        // Predicated region
        $region41: #{tpu_custom_call.1} parent=39 // pred_check
          %p828 = pneg %p135
        $region42: #{tpu_custom_call.1} parent=39 // pred_check_branch
          %830 = sbr.rel (%p828) target = $region44
        $region43: #{tpu_custom_call.1} parent=39 // pred_region
          %s831 = sand.u32 %s120, 1
          %s832 = scalar_lea.sflag [#allocation3], %s831
          %s833 = sand.u32 %s120, 1
          %s834 = smul.addr %s833, 16
          %s835 = scalar_lea.vmem [#allocation2], %s834
          %836 = dma.done %s832, 256
        $region44: #{tpu_custom_call.1} parent=39 // pred_fallthru
          _
      $region40: #{tpu_custom_call.1} parent=5 // pred_fallthru
        _
    $region6: #{tpu_custom_call.1} parent=1 // loop_footer
      %s16 = sadd.s32 1, %s12
    $region7: #{tpu_custom_call.1} parent=1 // loop_footer_branch
      %11 = sbr.rel target = $region3
    $region8: #{tpu_custom_call.1} parent=1 // loop_exit
      _
    %837 = vsyncpa [#allocation3], 1
    %s838 = scalar_lea.sflag [#allocation3], 1
    %839 = vsyncpa %s838, 1

</llo_original>
